<compile_context>
chip_gen: v6e
topology: v6e:2x2x1
jax: 0.10.0
libtpu: 0.0.40
codegen_flags: <defaults>
</compile_context>

<pallas_src>
import functools

import jax
import jax.numpy as jnp
from jax.experimental import pallas as pl
from jax.experimental.pallas import tpu as pltpu


# ----------------------------- Pallas kernel -----------------------------

def _fused_gcn_kernel(a_ref, x_ref, w1_ref, b1_ref, w2_ref, b2_ref,
                      p_ref, wf1_ref, bf1_ref, wf2_ref, bf2_ref, o_ref,
                      *, apply_sigmoid):
    a = a_ref[...]                                           # [N, N] bf16

    # GCN layer 1: relu(A @ X @ W1 + b1); F_in < H so contract (A @ X) first.
    ax = jnp.dot(a, x_ref[...], preferred_element_type=jnp.float32)
    h = jnp.dot(ax.astype(jnp.bfloat16), w1_ref[...],
                preferred_element_type=jnp.float32)
    h = jnp.maximum(h + b1_ref[...], 0.0).astype(jnp.bfloat16)

    # GCN layer 2: relu(A @ (h @ W2) + b2).
    hw = jnp.dot(h, w2_ref[...], preferred_element_type=jnp.float32)
    h = jnp.dot(a, hw.astype(jnp.bfloat16), preferred_element_type=jnp.float32)
    h = jnp.maximum(h + b2_ref[...], 0.0).astype(jnp.bfloat16)

    # global mean pool: P rows are 1/|graph b| normalized -> pooled = P @ h
    pooled = jnp.dot(p_ref[...], h, preferred_element_type=jnp.float32)

    # MLP head: relu(pooled @ Wf1 + bf1) @ Wf2 + bf2
    z = jnp.dot(pooled.astype(jnp.bfloat16), wf1_ref[...],
                preferred_element_type=jnp.float32)
    z = jnp.maximum(z + bf1_ref[...], 0.0).astype(jnp.bfloat16)
    out = jnp.dot(z, wf2_ref[...], preferred_element_type=jnp.float32) + bf2_ref[...]
    if apply_sigmoid:
        out = jax.nn.sigmoid(out)
    o_ref[...] = out


_VMEM = pl.BlockSpec(memory_space=pltpu.MemorySpace.VMEM)


def _round_up(v, m):
    return ((v + m - 1) // m) * m


def _pad2(arr, rows, cols, dtype):
    r, c = arr.shape
    return jnp.pad(arr, ((0, rows - r), (0, cols - c))).astype(dtype)


def gcn_forward(params, a_norm, x, p_norm, apply_sigmoid):
    (w1, b1), (w2, b2) = params["convs"]
    (wf1, bf1), (wf2, bf2) = params["fc"]

    n = a_norm.shape[0]
    bsz = p_norm.shape[0]
    f_in, hid = w1.shape
    fc_hid = wf1.shape[1]
    n_cls = wf2.shape[1]

    # lane-dense padded dims (zeros in the pad regions keep results exact)
    n_p = _round_up(n, 128)
    f_p = _round_up(f_in, 128)
    h_p = _round_up(hid, 128)
    fc_p = _round_up(fc_hid, 128)
    c_p = _round_up(n_cls, 128)
    b_p = _round_up(bsz, 16)

    bf, f32 = jnp.bfloat16, jnp.float32
    args = (
        _pad2(a_norm, n_p, n_p, bf),
        _pad2(x, n_p, f_p, bf),
        _pad2(w1, f_p, h_p, bf), _pad2(b1, 1, h_p, f32),
        _pad2(w2, h_p, h_p, bf), _pad2(b2, 1, h_p, f32),
        _pad2(p_norm, b_p, n_p, bf),
        _pad2(wf1, h_p, fc_p, bf), _pad2(bf1, 1, fc_p, f32),
        _pad2(wf2, fc_p, c_p, bf), _pad2(bf2, 1, c_p, f32),
    )

    kern = functools.partial(_fused_gcn_kernel, apply_sigmoid=apply_sigmoid)
    out = pl.pallas_call(
        kern,
        out_shape=jax.ShapeDtypeStruct((b_p, c_p), jnp.float32),
        in_specs=[_VMEM] * len(args),
        out_specs=_VMEM,
        compiler_params=pltpu.CompilerParams(vmem_limit_bytes=64 * 1024 * 1024),
    )(*args)
    return out[:bsz, :n_cls]


# ------------------------------ glue (plain JAX) ------------------------------

def normalized_adjacency(edge_index, num_nodes):
    """GCNConv normalization: D^{-1/2} (A + I) D^{-1/2}, dense [N, N]."""
    src, dst = edge_index
    a = jnp.zeros((num_nodes, num_nodes), jnp.float32)
    a = a.at[dst, src].set(1.0)                    # message from src -> dst
    a = a + jnp.eye(num_nodes, dtype=jnp.float32)  # self loops
    deg = a.sum(axis=1)
    d_inv_sqrt = jnp.where(deg > 0, 1.0 / jnp.sqrt(deg), 0.0)
    return d_inv_sqrt[:, None] * a * d_inv_sqrt[None, :]


def mean_pool_matrix(batch, num_graphs, num_nodes):
    """P[b, n] = 1/|graph b| if node n in graph b else 0."""
    onehot = (batch[None, :] == jnp.arange(num_graphs)[:, None]).astype(jnp.float32)
    counts = onehot.sum(axis=1, keepdims=True)
    return onehot / jnp.maximum(counts, 1.0)


def gcn_forward_ref(params, a_norm, x, p_norm, apply_sigmoid):
    h = x
    for (w, b) in params["convs"]:
        h = jnp.maximum(a_norm @ (h @ w) + b, 0.0)
    (w1, b1), (w2, b2) = params["fc"]
    pooled = p_norm @ h
    out = jnp.maximum(pooled @ w1 + b1, 0.0) @ w2 + b2
    return jax.nn.sigmoid(out) if apply_sigmoid else out


# --------------------------------- main ---------------------------------

if __name__ == "__main__":
    # synthetic hyperparameters
    NUM_NODES = 16          # total nodes across the batch of graphs
    IN_FEAT = 8
    HIDDEN = 32             # conv hidden dims
    FC_HIDDEN = 16
    NUM_CLASSES = 4
    NUM_GRAPHS = 2
    APPLY_SIGMOID = True    # hp['apply_sigmoid_in_last_layer']

    key = jax.random.PRNGKey(0)
    ks = jax.random.split(key, 8)

    # node features
    x = jax.random.normal(ks[0], (NUM_NODES, IN_FEAT), jnp.float32)

    # deterministic ring + a few cross edges (undirected, both directions listed)
    src = jnp.concatenate([
        jnp.arange(NUM_NODES), (jnp.arange(NUM_NODES) + 1) % NUM_NODES,
        jnp.array([0, 5, 3, 12]),
    ])
    dst = jnp.concatenate([
        (jnp.arange(NUM_NODES) + 1) % NUM_NODES, jnp.arange(NUM_NODES),
        jnp.array([5, 0, 12, 3]),
    ])
    edge_index = jnp.stack([src, dst])

    # node -> graph assignment (first half graph 0, second half graph 1)
    batch = jnp.concatenate([
        jnp.zeros(NUM_NODES // 2, jnp.int32),
        jnp.ones(NUM_NODES - NUM_NODES // 2, jnp.int32),
    ])

    a_norm = normalized_adjacency(edge_index, NUM_NODES)
    p_norm = mean_pool_matrix(batch, NUM_GRAPHS, NUM_NODES)

    # deterministic parameters (GCNConv weights + biases, affine head)
    def init(k, shape, fan_in):
        return jax.random.normal(k, shape, jnp.float32) / jnp.sqrt(float(fan_in))

    params = {
        "convs": [
            (init(ks[1], (IN_FEAT, HIDDEN), IN_FEAT),
             jnp.zeros((1, HIDDEN), jnp.float32)),
            (init(ks[2], (HIDDEN, HIDDEN), HIDDEN),
             jnp.zeros((1, HIDDEN), jnp.float32)),
        ],
        "fc": [
            (init(ks[3], (HIDDEN, FC_HIDDEN), HIDDEN),
             init(ks[4], (1, FC_HIDDEN), HIDDEN)),
            (init(ks[5], (FC_HIDDEN, NUM_CLASSES), FC_HIDDEN),
             init(ks[6], (1, NUM_CLASSES), FC_HIDDEN)),
        ],
    }

    out = gcn_forward(params, a_norm, x, p_norm, APPLY_SIGMOID)
    out = jax.block_until_ready(out)

    ref = gcn_forward_ref(params, a_norm, x, p_norm, APPLY_SIGMOID)
    assert out.shape == (NUM_GRAPHS, NUM_CLASSES)
    # bf16 MXU operands with f32 accumulation -> relaxed tolerance vs f32 ref
    assert jnp.allclose(out, ref, atol=3e-2, rtol=3e-2), (
        f"max abs err {jnp.max(jnp.abs(out - ref))}")

    print("KERNEL_OK")
</pallas_src>

<mosaic_0001>
module attributes {stable_mosaic.version = 11 : i64} {
  func.func @_fused_gcn_kernel(%arg0: memref<128x128xbf16, #tpu.memory_space<vmem>>, %arg1: memref<128x128xbf16, #tpu.memory_space<vmem>>, %arg2: memref<128x128xbf16, #tpu.memory_space<vmem>>, %arg3: memref<1x128xf32, #tpu.memory_space<vmem>>, %arg4: memref<128x128xbf16, #tpu.memory_space<vmem>>, %arg5: memref<1x128xf32, #tpu.memory_space<vmem>>, %arg6: memref<16x128xbf16, #tpu.memory_space<vmem>>, %arg7: memref<128x128xbf16, #tpu.memory_space<vmem>>, %arg8: memref<1x128xf32, #tpu.memory_space<vmem>>, %arg9: memref<128x128xbf16, #tpu.memory_space<vmem>>, %arg10: memref<1x128xf32, #tpu.memory_space<vmem>>, %arg11: memref<16x128xf32, #tpu.memory_space<vmem>>) attributes {dimension_semantics = [], scalar_prefetch = 0 : i64, scratch_operands = 0 : i64, tpu.core_type = #tpu.core_type<tc>} {
    %c0 = arith.constant 0 : index
    %c0_0 = arith.constant 0 : index
    %0 = vector.load %arg0[%c0, %c0_0] : memref<128x128xbf16, #tpu.memory_space<vmem>>, vector<128x128xbf16>
    %c0_1 = arith.constant 0 : index
    %c0_2 = arith.constant 0 : index
    %1 = vector.load %arg1[%c0_1, %c0_2] : memref<128x128xbf16, #tpu.memory_space<vmem>>, vector<128x128xbf16>
    %cst = arith.constant dense<0.000000e+00> : vector<128x128xf32>
    %2 = tpu.matmul %0, %1, %cst {dimension_numbers = #tpu.dot_dimension_numbers<[1], [0], [0], [1], [0, 0, 1, 1], [], []>} : vector<128x128xbf16>, vector<128x128xbf16>, vector<128x128xf32> -> vector<128x128xf32>
    %3 = arith.truncf %2 : vector<128x128xf32> to vector<128x128xbf16>
    %c0_3 = arith.constant 0 : index
    %c0_4 = arith.constant 0 : index
    %4 = vector.load %arg2[%c0_3, %c0_4] : memref<128x128xbf16, #tpu.memory_space<vmem>>, vector<128x128xbf16>
    %cst_5 = arith.constant dense<0.000000e+00> : vector<128x128xf32>
    %5 = tpu.matmul %3, %4, %cst_5 {dimension_numbers = #tpu.dot_dimension_numbers<[1], [0], [0], [1], [0, 0, 1, 1], [], []>} : vector<128x128xbf16>, vector<128x128xbf16>, vector<128x128xf32> -> vector<128x128xf32>
    %c0_6 = arith.constant 0 : index
    %c0_7 = arith.constant 0 : index
    %6 = vector.load %arg3[%c0_6, %c0_7] : memref<1x128xf32, #tpu.memory_space<vmem>>, vector<1x128xf32>
    %7 = vector.broadcast %6 : vector<1x128xf32> to vector<128x128xf32>
    %8 = arith.addf %5, %7 : vector<128x128xf32>
    %cst_8 = arith.constant 0.000000e+00 : f32
    %9 = vector.broadcast %cst_8 : f32 to vector<128x128xf32>
    %10 = arith.maximumf %8, %9 : vector<128x128xf32>
    %11 = arith.truncf %10 : vector<128x128xf32> to vector<128x128xbf16>
    %c0_9 = arith.constant 0 : index
    %c0_10 = arith.constant 0 : index
    %12 = vector.load %arg4[%c0_9, %c0_10] : memref<128x128xbf16, #tpu.memory_space<vmem>>, vector<128x128xbf16>
    %cst_11 = arith.constant dense<0.000000e+00> : vector<128x128xf32>
    %13 = tpu.matmul %11, %12, %cst_11 {dimension_numbers = #tpu.dot_dimension_numbers<[1], [0], [0], [1], [0, 0, 1, 1], [], []>} : vector<128x128xbf16>, vector<128x128xbf16>, vector<128x128xf32> -> vector<128x128xf32>
    %14 = arith.truncf %13 : vector<128x128xf32> to vector<128x128xbf16>
    %cst_12 = arith.constant dense<0.000000e+00> : vector<128x128xf32>
    %15 = tpu.matmul %0, %14, %cst_12 {dimension_numbers = #tpu.dot_dimension_numbers<[1], [0], [0], [1], [0, 0, 1, 1], [], []>} : vector<128x128xbf16>, vector<128x128xbf16>, vector<128x128xf32> -> vector<128x128xf32>
    %c0_13 = arith.constant 0 : index
    %c0_14 = arith.constant 0 : index
    %16 = vector.load %arg5[%c0_13, %c0_14] : memref<1x128xf32, #tpu.memory_space<vmem>>, vector<1x128xf32>
    %17 = vector.broadcast %16 : vector<1x128xf32> to vector<128x128xf32>
    %18 = arith.addf %15, %17 : vector<128x128xf32>
    %cst_15 = arith.constant 0.000000e+00 : f32
    %19 = vector.broadcast %cst_15 : f32 to vector<128x128xf32>
    %20 = arith.maximumf %18, %19 : vector<128x128xf32>
    %21 = arith.truncf %20 : vector<128x128xf32> to vector<128x128xbf16>
    %c0_16 = arith.constant 0 : index
    %c0_17 = arith.constant 0 : index
    %22 = vector.load %arg6[%c0_16, %c0_17] : memref<16x128xbf16, #tpu.memory_space<vmem>>, vector<16x128xbf16>
    %cst_18 = arith.constant dense<0.000000e+00> : vector<16x128xf32>
    %23 = tpu.matmul %22, %21, %cst_18 {dimension_numbers = #tpu.dot_dimension_numbers<[1], [0], [0], [1], [0, 0, 1, 1], [], []>} : vector<16x128xbf16>, vector<128x128xbf16>, vector<16x128xf32> -> vector<16x128xf32>
    %24 = arith.truncf %23 : vector<16x128xf32> to vector<16x128xbf16>
    %c0_19 = arith.constant 0 : index
    %c0_20 = arith.constant 0 : index
    %25 = vector.load %arg7[%c0_19, %c0_20] : memref<128x128xbf16, #tpu.memory_space<vmem>>, vector<128x128xbf16>
    %cst_21 = arith.constant dense<0.000000e+00> : vector<16x128xf32>
    %26 = tpu.matmul %24, %25, %cst_21 {dimension_numbers = #tpu.dot_dimension_numbers<[1], [0], [0], [1], [0, 0, 1, 1], [], []>} : vector<16x128xbf16>, vector<128x128xbf16>, vector<16x128xf32> -> vector<16x128xf32>
    %c0_22 = arith.constant 0 : index
    %c0_23 = arith.constant 0 : index
    %27 = vector.load %arg8[%c0_22, %c0_23] : memref<1x128xf32, #tpu.memory_space<vmem>>, vector<1x128xf32>
    %28 = vector.broadcast %27 : vector<1x128xf32> to vector<16x128xf32>
    %29 = arith.addf %26, %28 : vector<16x128xf32>
    %cst_24 = arith.constant 0.000000e+00 : f32
    %30 = vector.broadcast %cst_24 : f32 to vector<16x128xf32>
    %31 = arith.maximumf %29, %30 : vector<16x128xf32>
    %32 = arith.truncf %31 : vector<16x128xf32> to vector<16x128xbf16>
    %c0_25 = arith.constant 0 : index
    %c0_26 = arith.constant 0 : index
    %33 = vector.load %arg9[%c0_25, %c0_26] : memref<128x128xbf16, #tpu.memory_space<vmem>>, vector<128x128xbf16>
    %cst_27 = arith.constant dense<0.000000e+00> : vector<16x128xf32>
    %34 = tpu.matmul %32, %33, %cst_27 {dimension_numbers = #tpu.dot_dimension_numbers<[1], [0], [0], [1], [0, 0, 1, 1], [], []>} : vector<16x128xbf16>, vector<128x128xbf16>, vector<16x128xf32> -> vector<16x128xf32>
    %c0_28 = arith.constant 0 : index
    %c0_29 = arith.constant 0 : index
    %35 = vector.load %arg10[%c0_28, %c0_29] : memref<1x128xf32, #tpu.memory_space<vmem>>, vector<1x128xf32>
    %36 = vector.broadcast %35 : vector<1x128xf32> to vector<16x128xf32>
    %37 = arith.addf %34, %36 : vector<16x128xf32>
    %38 = arith.negf %37 : vector<16x128xf32>
    %39 = math.exp %38 : vector<16x128xf32>
    %cst_30 = arith.constant 1.000000e+00 : f32
    %40 = vector.broadcast %cst_30 : f32 to vector<16x128xf32>
    %41 = arith.addf %40, %39 : vector<16x128xf32>
    %42 = arith.divf %40, %41 : vector<16x128xf32>
    %c0_31 = arith.constant 0 : index
    %c0_32 = arith.constant 0 : index
    %43 = vector.load %arg11[%c0_31, %c0_32] : memref<16x128xf32, #tpu.memory_space<vmem>>, vector<16x128xf32>
    tpu.vector_store %arg11[%c0_31, %c0_32], %42 {strides = array<i32>} : memref<16x128xf32, #tpu.memory_space<vmem>>, vector<16x128xf32>,
    return
  }
}

</mosaic_0001>

<llo_original>
// kernel: tpu_custom_call.1
$region0: #{tpu_custom_call.1}
  #allocation0 [shape = 'u32[]', space=smem, size = 0x4, offset = 0x4, fixed_abs, tag = 'smem constant byte address 0x4 - core index']
  #allocation1 [shape = 'u32[144,128]{1,0:T(1,128)}', space=vmem, size = 0x12000, scoped, tag = 'internal scratch']
  %s0 = inlined_call_operand.hbm [shape: bf16[128,128], index: 0, kind: input, shape index: {}]
  %s1 = inlined_call_operand.hbm [shape: bf16[128,128], index: 1, kind: input, shape index: {}]
  %s2 = inlined_call_operand.hbm [shape: bf16[128,128], index: 2, kind: input, shape index: {}]
  %s3 = inlined_call_operand.vmem [shape: f32[1,128], index: 3, kind: input, shape index: {}]
  %s4 = inlined_call_operand.hbm [shape: bf16[128,128], index: 4, kind: input, shape index: {}]
  %s5 = inlined_call_operand.vmem [shape: f32[1,128], index: 5, kind: input, shape index: {}]
  %s6 = inlined_call_operand.vmem [shape: bf16[16,128], index: 6, kind: input, shape index: {}]
  %s7 = inlined_call_operand.hbm [shape: bf16[128,128], index: 7, kind: input, shape index: {}]
  %s8 = inlined_call_operand.vmem [shape: f32[1,128], index: 8, kind: input, shape index: {}]
  %s9 = inlined_call_operand.hbm [shape: bf16[128,128], index: 9, kind: input, shape index: {}]
  %s10 = inlined_call_operand.vmem [shape: f32[1,128], index: 10, kind: input, shape index: {}]
  %s11 = inlined_call_operand.hbm [shape: f32[16,128], index: 11, kind: output, shape index: {}]
  %s12 = sld [smem:[#allocation0]]
  $region78: #{tpu_custom_call.1} parent=0
    _
  %s14 = ssub.s32 1, %s12
  %s15 = scalar_select 0, %s14, %s12
  $region1: #{tpu_custom_call.1} parent=0
    #allocation2 [shape = 'u8[32768]{0}', space=vmem, size = 0x8000, scoped, tag = 'input window, operand 0, single buffered']
    #allocation3 [shape = 's32[1]{0}', space=sflag, size = 0x4, scoped, tag = 'scoped memory for tpu_custom_call.1']
    #allocation4 [shape = 's32[1]{0}', space=sflag, size = 0x4, scoped, tag = 'scoped memory for tpu_custom_call.1']
    #allocation5 [shape = 'u8[32768]{0}', space=vmem, size = 0x8000, scoped, tag = 'input window, operand 1, single buffered']
    #allocation6 [shape = 's32[1]{0}', space=sflag, size = 0x4, scoped, tag = 'scoped memory for tpu_custom_call.1']
    #allocation7 [shape = 'u8[32768]{0}', space=vmem, size = 0x8000, scoped, tag = 'input window, operand 2, single buffered']
    #allocation8 [shape = 'u8[32768]{0}', space=vmem, size = 0x8000, scoped, tag = 'input window, operand 4, single buffered']
    #allocation9 [shape = 's32[1]{0}', space=sflag, size = 0x4, scoped, tag = 'scoped memory for tpu_custom_call.1']
    #allocation10 [shape = 'u8[32768]{0}', space=vmem, size = 0x8000, scoped, tag = 'input window, operand 7, single buffered']
    #allocation11 [shape = 'u8[32768]{0}', space=vmem, size = 0x8000, scoped, tag = 'input window, operand 9, single buffered']
    #allocation12 [shape = 's32[1]{0}', space=sflag, size = 0x4, scoped, tag = 'scoped memory for tpu_custom_call.1']
    #allocation13 [shape = 'u8[8192]{0}', space=vmem, size = 0x2000, scoped, tag = 'output window, operand 0, single buffered']
    %16 = vsyncpa [#allocation3], 0
    %17 = vsyncpa [#allocation6], 0
    %18 = vsyncpa [#allocation9], 0
    %19 = vsyncpa [#allocation12], 0
    %20 = vsyncpa [#allocation4], 0
    // Predicated region
    $region2: #{tpu_custom_call.1} parent=1 // pred_check
      _
    $region3: #{tpu_custom_call.1} parent=1 // pred_check_branch
      %22 = sbr.rel (0) target = $region5
    $region4: #{tpu_custom_call.1} parent=1 // pred_region
      %s24 = ssub.s32 1024, 1024
      %25 = vsyncadd [#allocation3], %s24
      %s26 = sshll.u32 [#allocation2], 4
      %s27 = int_to_ptr.vmem [resolvable:$true] %s26
      %32 = dma.hbm_to_vmem [thread:$0]  %s0, 1024, %s27, [#allocation3], 64, 64, 4
    $region5: #{tpu_custom_call.1} parent=1 // pred_fallthru
      _
    // Predicated region
    $region6: #{tpu_custom_call.1} parent=1 // pred_check
      _
    $region7: #{tpu_custom_call.1} parent=1 // pred_check_branch
      %34 = sbr.rel (0) target = $region9
    $region8: #{tpu_custom_call.1} parent=1 // pred_region
      %s36 = ssub.s32 1024, 1024
      %37 = vsyncadd [#allocation6], %s36
      %s38 = sshll.u32 [#allocation5], 4
      %s39 = int_to_ptr.vmem [resolvable:$true] %s38
      %44 = dma.hbm_to_vmem [thread:$0]  %s1, 1024, %s39, [#allocation6], 64, 64, 4
    $region9: #{tpu_custom_call.1} parent=1 // pred_fallthru
      _
    // Predicated region
    $region10: #{tpu_custom_call.1} parent=1 // pred_check
      _
    $region11: #{tpu_custom_call.1} parent=1 // pred_check_branch
      %46 = sbr.rel (0) target = $region13
    $region12: #{tpu_custom_call.1} parent=1 // pred_region
      %s48 = ssub.s32 1024, 1024
      %49 = vsyncadd [#allocation6], %s48
      %s50 = sshll.u32 [#allocation7], 4
      %s51 = int_to_ptr.vmem [resolvable:$true] %s50
      %56 = dma.hbm_to_vmem [thread:$0]  %s2, 1024, %s51, [#allocation6], 64, 64, 4
    $region13: #{tpu_custom_call.1} parent=1 // pred_fallthru
      _
    // Predicated region
    $region14: #{tpu_custom_call.1} parent=1 // pred_check
      _
    $region15: #{tpu_custom_call.1} parent=1 // pred_check_branch
      %58 = sbr.rel (0) target = $region17
    $region16: #{tpu_custom_call.1} parent=1 // pred_region
      _
    $region17: #{tpu_custom_call.1} parent=1 // pred_fallthru
      _
    // Predicated region
    $region18: #{tpu_custom_call.1} parent=1 // pred_check
      _
    $region19: #{tpu_custom_call.1} parent=1 // pred_check_branch
      %60 = sbr.rel (0) target = $region21
    $region20: #{tpu_custom_call.1} parent=1 // pred_region
      %s62 = ssub.s32 1024, 1024
      %63 = vsyncadd [#allocation9], %s62
      %s64 = sshll.u32 [#allocation8], 4
      %s65 = int_to_ptr.vmem [resolvable:$true] %s64
      %70 = dma.hbm_to_vmem [thread:$0]  %s4, 1024, %s65, [#allocation9], 64, 64, 4
    $region21: #{tpu_custom_call.1} parent=1 // pred_fallthru
      _
    // Predicated region
    $region22: #{tpu_custom_call.1} parent=1 // pred_check
      _
    $region23: #{tpu_custom_call.1} parent=1 // pred_check_branch
      %72 = sbr.rel (0) target = $region25
    $region24: #{tpu_custom_call.1} parent=1 // pred_region
      _
    $region25: #{tpu_custom_call.1} parent=1 // pred_fallthru
      _
    // Predicated region
    $region26: #{tpu_custom_call.1} parent=1 // pred_check
      _
    $region27: #{tpu_custom_call.1} parent=1 // pred_check_branch
      %74 = sbr.rel (0) target = $region29
    $region28: #{tpu_custom_call.1} parent=1 // pred_region
      _
    $region29: #{tpu_custom_call.1} parent=1 // pred_fallthru
      _
    // Predicated region
    $region30: #{tpu_custom_call.1} parent=1 // pred_check
      _
    $region31: #{tpu_custom_call.1} parent=1 // pred_check_branch
      %76 = sbr.rel (0) target = $region33
    $region32: #{tpu_custom_call.1} parent=1 // pred_region
      %s78 = ssub.s32 1024, 1024
      %79 = vsyncadd [#allocation9], %s78
      %s80 = sshll.u32 [#allocation10], 4
      %s81 = int_to_ptr.vmem [resolvable:$true] %s80
      %86 = dma.hbm_to_vmem [thread:$0]  %s7, 1024, %s81, [#allocation9], 64, 64, 4
    $region33: #{tpu_custom_call.1} parent=1 // pred_fallthru
      _
    // Predicated region
    $region34: #{tpu_custom_call.1} parent=1 // pred_check
      _
    $region35: #{tpu_custom_call.1} parent=1 // pred_check_branch
      %88 = sbr.rel (0) target = $region37
    $region36: #{tpu_custom_call.1} parent=1 // pred_region
      _
    $region37: #{tpu_custom_call.1} parent=1 // pred_fallthru
      _
    // Predicated region
    $region38: #{tpu_custom_call.1} parent=1 // pred_check
      _
    $region39: #{tpu_custom_call.1} parent=1 // pred_check_branch
      %90 = sbr.rel (0) target = $region41
    $region40: #{tpu_custom_call.1} parent=1 // pred_region
      %s92 = ssub.s32 1024, 1024
      %93 = vsyncadd [#allocation12], %s92
      %s94 = sshll.u32 [#allocation11], 4
      %s95 = int_to_ptr.vmem [resolvable:$true] %s94
      %100 = dma.hbm_to_vmem [thread:$0]  %s9, 1024, %s95, [#allocation12], 64, 64, 4
    $region41: #{tpu_custom_call.1} parent=1 // pred_fallthru
      _
    // Predicated region
    $region42: #{tpu_custom_call.1} parent=1 // pred_check
      _
    $region43: #{tpu_custom_call.1} parent=1 // pred_check_branch
      %102 = sbr.rel (0) target = $region45
    $region44: #{tpu_custom_call.1} parent=1 // pred_region
      _
    $region45: #{tpu_custom_call.1} parent=1 // pred_fallthru
      _
    // Predicated region
    $region46: #{tpu_custom_call.1} parent=1 // pred_check
      _
    $region47: #{tpu_custom_call.1} parent=1 // pred_check_branch
      %104 = sbr.rel (0) target = $region49
    $region48: #{tpu_custom_call.1} parent=1 // pred_region
      %105 = dma.done [#allocation3], 1024
    $region49: #{tpu_custom_call.1} parent=1 // pred_fallthru
      _
    // Predicated region
    $region50: #{tpu_custom_call.1} parent=1 // pred_check
      _
    $region51: #{tpu_custom_call.1} parent=1 // pred_check_branch
      %107 = sbr.rel (0) target = $region53
    $region52: #{tpu_custom_call.1} parent=1 // pred_region
      %108 = dma.done [#allocation6], 1024
    $region53: #{tpu_custom_call.1} parent=1 // pred_fallthru
      _
    // Predicated region
    $region54: #{tpu_custom_call.1} parent=1 // pred_check
      _
    $region55: #{tpu_custom_call.1} parent=1 // pred_check_branch
      %110 = sbr.rel (0) target = $region57
    $region56: #{tpu_custom_call.1} parent=1 // pred_region
      %111 = dma.done [#allocation6], 1024
    $region57: #{tpu_custom_call.1} parent=1 // pred_fallthru
      _
    // Predicated region
    $region58: #{tpu_custom_call.1} parent=1 // pred_check
      _
    $region59: #{tpu_custom_call.1} parent=1 // pred_check_branch
      %113 = sbr.rel (0) target = $region61
    $region60: #{tpu_custom_call.1} parent=1 // pred_region
      %114 = dma.done [#allocation9], 1024
    $region61: #{tpu_custom_call.1} parent=1 // pred_fallthru
      _
    // Predicated region
    $region62: #{tpu_custom_call.1} parent=1 // pred_check
      _
    $region63: #{tpu_custom_call.1} parent=1 // pred_check_branch
      %116 = sbr.rel (0) target = $region65
    $region64: #{tpu_custom_call.1} parent=1 // pred_region
      %117 = dma.done [#allocation9], 1024
    $region65: #{tpu_custom_call.1} parent=1 // pred_fallthru
      _
    // Predicated region
    $region66: #{tpu_custom_call.1} parent=1 // pred_check
      _
    $region67: #{tpu_custom_call.1} parent=1 // pred_check_branch
      %119 = sbr.rel (0) target = $region69
    $region68: #{tpu_custom_call.1} parent=1 // pred_region
      %120 = dma.done [#allocation12], 1024
    $region69: #{tpu_custom_call.1} parent=1 // pred_fallthru
      _
    %v122 = vld [vmem:[#allocation2] sm:$0xf]
    %v123 = vld [vmem:[#allocation2 + $0x4] sm:$0xf]
    %v124 = vld [vmem:[#allocation2 + $0x8] sm:$0xf]
    %v125 = vld [vmem:[#allocation2 + $0xc] sm:$0xf]
    %v126 = vld [vmem:[#allocation2 + $0x10] sm:$0xf]
    %v127 = vld [vmem:[#allocation2 + $0x14] sm:$0xf]
    %v128 = vld [vmem:[#allocation2 + $0x18] sm:$0xf]
    %v129 = vld [vmem:[#allocation2 + $0x1c] sm:$0xf]
    %v130 = vld [vmem:[#allocation2 + $0x20] sm:$0xf]
    %v131 = vld [vmem:[#allocation2 + $0x24] sm:$0xf]
    %v132 = vld [vmem:[#allocation2 + $0x28] sm:$0xf]
    %v133 = vld [vmem:[#allocation2 + $0x2c] sm:$0xf]
    %v134 = vld [vmem:[#allocation2 + $0x30] sm:$0xf]
    %v135 = vld [vmem:[#allocation2 + $0x34] sm:$0xf]
    %v136 = vld [vmem:[#allocation2 + $0x38] sm:$0xf]
    %v137 = vld [vmem:[#allocation2 + $0x3c] sm:$0xf]
    %v138 = vld [vmem:[#allocation5] sm:$0xf]
    %v139 = vld [vmem:[#allocation5 + $0x4] sm:$0xf]
    %v140 = vld [vmem:[#allocation5 + $0x8] sm:$0xf]
    %v141 = vld [vmem:[#allocation5 + $0xc] sm:$0xf]
    %v142 = vld [vmem:[#allocation5 + $0x10] sm:$0xf]
    %v143 = vld [vmem:[#allocation5 + $0x14] sm:$0xf]
    %v144 = vld [vmem:[#allocation5 + $0x18] sm:$0xf]
    %v145 = vld [vmem:[#allocation5 + $0x1c] sm:$0xf]
    %v146 = vld [vmem:[#allocation5 + $0x20] sm:$0xf]
    %v147 = vld [vmem:[#allocation5 + $0x24] sm:$0xf]
    %v148 = vld [vmem:[#allocation5 + $0x28] sm:$0xf]
    %v149 = vld [vmem:[#allocation5 + $0x2c] sm:$0xf]
    %v150 = vld [vmem:[#allocation5 + $0x30] sm:$0xf]
    %v151 = vld [vmem:[#allocation5 + $0x34] sm:$0xf]
    %v152 = vld [vmem:[#allocation5 + $0x38] sm:$0xf]
    %v153 = vld [vmem:[#allocation5 + $0x3c] sm:$0xf]
    %v170 = vunpack.c.l.b16 %v122
    %v171 = vunpack.c.l.b16 %v123
    %v172 = vunpack.c.l.b16 %v124
    %v173 = vunpack.c.l.b16 %v125
    %v174 = vunpack.c.l.b16 %v126
    %v175 = vunpack.c.l.b16 %v127
    %v176 = vunpack.c.l.b16 %v128
    %v177 = vunpack.c.l.b16 %v129
    %v178 = vunpack.c.l.b16 %v130
    %v179 = vunpack.c.l.b16 %v131
    %v180 = vunpack.c.l.b16 %v132
    %v181 = vunpack.c.l.b16 %v133
    %v182 = vunpack.c.l.b16 %v134
    %v183 = vunpack.c.l.b16 %v135
    %v184 = vunpack.c.l.b16 %v136
    %v185 = vunpack.c.l.b16 %v137
    %v186 = vpack.c.b16 %v171, %v170
    %v187 = vpack.c.b16 %v173, %v172
    %v188 = vpack.c.b16 %v175, %v174
    %v189 = vpack.c.b16 %v177, %v176
    %v190 = vpack.c.b16 %v179, %v178
    %v191 = vpack.c.b16 %v181, %v180
    %v192 = vpack.c.b16 %v183, %v182
    %v193 = vpack.c.b16 %v185, %v184
    %v218 = vunpack.c.l.b16 %v138
    %v219 = vunpack.c.l.b16 %v139
    %v220 = vunpack.c.l.b16 %v140
    %v221 = vunpack.c.l.b16 %v141
    %v222 = vunpack.c.l.b16 %v142
    %v223 = vunpack.c.l.b16 %v143
    %v224 = vunpack.c.l.b16 %v144
    %v225 = vunpack.c.l.b16 %v145
    %v226 = vunpack.c.l.b16 %v146
    %v227 = vunpack.c.l.b16 %v147
    %v228 = vunpack.c.l.b16 %v148
    %v229 = vunpack.c.l.b16 %v149
    %v230 = vunpack.c.l.b16 %v150
    %v231 = vunpack.c.l.b16 %v151
    %v232 = vunpack.c.l.b16 %v152
    %v233 = vunpack.c.l.b16 %v153
    %v234 = vpack.c.b16 %v219, %v218
    %v235 = vpack.c.b16 %v221, %v220
    %v236 = vpack.c.b16 %v223, %v222
    %v237 = vpack.c.b16 %v225, %v224
    %v238 = vpack.c.b16 %v227, %v226
    %v239 = vpack.c.b16 %v229, %v228
    %v240 = vpack.c.b16 %v231, %v230
    %v241 = vpack.c.b16 %v233, %v232
    %250 = vmatprep.subr.bf16.mxu0 0
    %251 = vmatpush1.bf16.msra.mxu0 %v241
    %252 = vmatprep.subr.bf16.mxu0 0
    %253 = vmatpush1.bf16.msra.mxu0 %v240
    %254 = vmatprep.subr.bf16.mxu0 0
    %255 = vmatpush1.bf16.msra.mxu0 %v239
    %256 = vmatprep.subr.bf16.mxu0 0
    %257 = vmatpush1.bf16.msra.mxu0 %v238
    %258 = vmatprep.subr.bf16.mxu0 0
    %259 = vmatpush1.bf16.msra.mxu0 %v237
    %260 = vmatprep.subr.bf16.mxu0 0
    %261 = vmatpush1.bf16.msra.mxu0 %v236
    %262 = vmatprep.subr.bf16.mxu0 0
    %263 = vmatpush1.bf16.msra.mxu0 %v235
    %264 = vmatprep.subr.bf16.mxu0 0
    %265 = vmatpush1.bf16.msra.mxu0 %v234
    %266 = vmatprep.subr.bf16.mxu0 0
    %267 = vmatpush2.bf16.msra.mxu0 0
    %268 = vmatprep.subr.bf16.mxu0 0
    %269 = vmatpush2.bf16.msra.mxu0 0
    %270 = vmatprep.subr.bf16.mxu0 0
    %271 = vmatpush2.bf16.msra.mxu0 0
    %272 = vmatprep.subr.bf16.mxu0 0
    %273 = vmatpush2.bf16.msra.mxu0 0
    %274 = vmatprep.subr.bf16.mxu0 0
    %275 = vmatpush2.bf16.msra.mxu0 0
    %276 = vmatprep.subr.bf16.mxu0 0
    %277 = vmatpush2.bf16.msra.mxu0 0
    %278 = vmatprep.subr.bf16.mxu0 0
    %279 = vmatpush2.bf16.msra.mxu0 0
    %280 = vmatprep.subr.bf16.mxu0 0
    %281 = vmatpush2.bf16.msra.mxu0 0
    %282 = vmatprep.mubr.bf16.mxu0 0
    %283 = vmatmul.mubr.bf16.gmra.mxu0 %v186
    %v284 = vpop.f32.mrf.mxu0
    %v285 = vadd.f32 0.0, %v284
    %v286 = vpop.f32.mrf.mxu0
    %v287 = vpop.f32.mrf.mxu0
    %v288 = vadd.f32 0.0, %v287
    %v289 = vpop.f32.mrf.mxu0
    %290 = vmatprep.mubr.bf16.mxu0 0
    %291 = vmatmul.mubr.bf16.gmra.mxu0 %v187
    %v292 = vpop.f32.mrf.mxu0
    %v293 = vadd.f32 0.0, %v292
    %v294 = vpop.f32.mrf.mxu0
    %v295 = vpop.f32.mrf.mxu0
    %v296 = vadd.f32 0.0, %v295
    %v297 = vpop.f32.mrf.mxu0
    %298 = vmatprep.mubr.bf16.mxu0 0
    %299 = vmatmul.mubr.bf16.gmra.mxu0 %v188
    %v300 = vpop.f32.mrf.mxu0
    %v301 = vadd.f32 0.0, %v300
    %v302 = vpop.f32.mrf.mxu0
    %v303 = vpop.f32.mrf.mxu0
    %v304 = vadd.f32 0.0, %v303
    %v305 = vpop.f32.mrf.mxu0
    %306 = vmatprep.mubr.bf16.mxu0 0
    %307 = vmatmul.mubr.bf16.gmra.mxu0 %v189
    %v308 = vpop.f32.mrf.mxu0
    %v309 = vadd.f32 0.0, %v308
    %v310 = vpop.f32.mrf.mxu0
    %v311 = vpop.f32.mrf.mxu0
    %v312 = vadd.f32 0.0, %v311
    %v313 = vpop.f32.mrf.mxu0
    %314 = vmatprep.mubr.bf16.mxu0 0
    %315 = vmatmul.mubr.bf16.gmra.mxu0 %v190
    %v316 = vpop.f32.mrf.mxu0
    %v317 = vadd.f32 0.0, %v316
    %v318 = vpop.f32.mrf.mxu0
    %v319 = vpop.f32.mrf.mxu0
    %v320 = vadd.f32 0.0, %v319
    %v321 = vpop.f32.mrf.mxu0
    %322 = vmatprep.mubr.bf16.mxu0 0
    %323 = vmatmul.mubr.bf16.gmra.mxu0 %v191
    %v324 = vpop.f32.mrf.mxu0
    %v325 = vadd.f32 0.0, %v324
    %v326 = vpop.f32.mrf.mxu0
    %v327 = vpop.f32.mrf.mxu0
    %v328 = vadd.f32 0.0, %v327
    %v329 = vpop.f32.mrf.mxu0
    %330 = vmatprep.mubr.bf16.mxu0 0
    %331 = vmatmul.mubr.bf16.gmra.mxu0 %v192
    %v332 = vpop.f32.mrf.mxu0
    %v333 = vadd.f32 0.0, %v332
    %v334 = vpop.f32.mrf.mxu0
    %v335 = vpop.f32.mrf.mxu0
    %v336 = vadd.f32 0.0, %v335
    %v337 = vpop.f32.mrf.mxu0
    %338 = vmatprep.mubr.bf16.mxu0 0
    %339 = vmatmul.mubr.bf16.gmra.mxu0 %v193
    %v340 = vpop.f32.mrf.mxu0
    %v341 = vadd.f32 0.0, %v340
    %v342 = vpop.f32.mrf.mxu0
    %v343 = vpop.f32.mrf.mxu0
    %v344 = vadd.f32 0.0, %v343
    %v345 = vpop.f32.mrf.mxu0
    %346 = vdwg.mxu0
    %v347 = vpack.c.bf16 %v288, %v285
    %v348 = vpack.c.bf16 %v296, %v293
    %v349 = vpack.c.bf16 %v304, %v301
    %v350 = vpack.c.bf16 %v312, %v309
    %v351 = vpack.c.bf16 %v320, %v317
    %v352 = vpack.c.bf16 %v328, %v325
    %v353 = vpack.c.bf16 %v336, %v333
    %v354 = vpack.c.bf16 %v344, %v341
    %v355 = vld [vmem:[#allocation7] sm:$0xf]
    %v356 = vld [vmem:[#allocation7 + $0x4] sm:$0xf]
    %v357 = vld [vmem:[#allocation7 + $0x8] sm:$0xf]
    %v358 = vld [vmem:[#allocation7 + $0xc] sm:$0xf]
    %v359 = vld [vmem:[#allocation7 + $0x10] sm:$0xf]
    %v360 = vld [vmem:[#allocation7 + $0x14] sm:$0xf]
    %v361 = vld [vmem:[#allocation7 + $0x18] sm:$0xf]
    %v362 = vld [vmem:[#allocation7 + $0x1c] sm:$0xf]
    %v363 = vld [vmem:[#allocation7 + $0x20] sm:$0xf]
    %v364 = vld [vmem:[#allocation7 + $0x24] sm:$0xf]
    %v365 = vld [vmem:[#allocation7 + $0x28] sm:$0xf]
    %v366 = vld [vmem:[#allocation7 + $0x2c] sm:$0xf]
    %v367 = vld [vmem:[#allocation7 + $0x30] sm:$0xf]
    %v368 = vld [vmem:[#allocation7 + $0x34] sm:$0xf]
    %v369 = vld [vmem:[#allocation7 + $0x38] sm:$0xf]
    %v370 = vld [vmem:[#allocation7 + $0x3c] sm:$0xf]
    %v371 = vld [vmem:[%s3] sm:$0x1]
    %v373 = vlaneseq
    %v374 = vshrl.u32 %v373, 7
    %v375 = vsub.s32 0, %v374
    %v376 = vrot.slane %v371, %v375
    %v394 = vunpack.c.l.b16 %v355
    %v395 = vunpack.c.l.b16 %v356
    %v396 = vunpack.c.l.b16 %v357
    %v397 = vunpack.c.l.b16 %v358
    %v398 = vunpack.c.l.b16 %v359
    %v399 = vunpack.c.l.b16 %v360
    %v400 = vunpack.c.l.b16 %v361
    %v401 = vunpack.c.l.b16 %v362
    %v402 = vunpack.c.l.b16 %v363
    %v403 = vunpack.c.l.b16 %v364
    %v404 = vunpack.c.l.b16 %v365
    %v405 = vunpack.c.l.b16 %v366
    %v406 = vunpack.c.l.b16 %v367
    %v407 = vunpack.c.l.b16 %v368
    %v408 = vunpack.c.l.b16 %v369
    %v409 = vunpack.c.l.b16 %v370
    %v410 = vpack.c.b16 %v395, %v394
    %v411 = vpack.c.b16 %v397, %v396
    %v412 = vpack.c.b16 %v399, %v398
    %v413 = vpack.c.b16 %v401, %v400
    %v414 = vpack.c.b16 %v403, %v402
    %v415 = vpack.c.b16 %v405, %v404
    %v416 = vpack.c.b16 %v407, %v406
    %v417 = vpack.c.b16 %v409, %v408
    %426 = vmatprep.subr.bf16.mxu0 0
    %427 = vmatpush1.bf16.msra.mxu0 %v417
    %428 = vmatprep.subr.bf16.mxu0 0
    %429 = vmatpush1.bf16.msra.mxu0 %v416
    %430 = vmatprep.subr.bf16.mxu0 0
    %431 = vmatpush1.bf16.msra.mxu0 %v415
    %432 = vmatprep.subr.bf16.mxu0 0
    %433 = vmatpush1.bf16.msra.mxu0 %v414
    %434 = vmatprep.subr.bf16.mxu0 0
    %435 = vmatpush1.bf16.msra.mxu0 %v413
    %436 = vmatprep.subr.bf16.mxu0 0
    %437 = vmatpush1.bf16.msra.mxu0 %v412
    %438 = vmatprep.subr.bf16.mxu0 0
    %439 = vmatpush1.bf16.msra.mxu0 %v411
    %440 = vmatprep.subr.bf16.mxu0 0
    %441 = vmatpush1.bf16.msra.mxu0 %v410
    %442 = vmatprep.subr.bf16.mxu0 0
    %443 = vmatpush2.bf16.msra.mxu0 0
    %444 = vmatprep.subr.bf16.mxu0 0
    %445 = vmatpush2.bf16.msra.mxu0 0
    %446 = vmatprep.subr.bf16.mxu0 0
    %447 = vmatpush2.bf16.msra.mxu0 0
    %448 = vmatprep.subr.bf16.mxu0 0
    %449 = vmatpush2.bf16.msra.mxu0 0
    %450 = vmatprep.subr.bf16.mxu0 0
    %451 = vmatpush2.bf16.msra.mxu0 0
    %452 = vmatprep.subr.bf16.mxu0 0
    %453 = vmatpush2.bf16.msra.mxu0 0
    %454 = vmatprep.subr.bf16.mxu0 0
    %455 = vmatpush2.bf16.msra.mxu0 0
    %456 = vmatprep.subr.bf16.mxu0 0
    %457 = vmatpush2.bf16.msra.mxu0 0
    %458 = vmatprep.mubr.bf16.mxu0 0
    %459 = vmatmul.mubr.bf16.gmra.mxu0 %v347
    %v460 = vpop.f32.mrf.mxu0
    %v461 = vadd.f32 %v376, %v460
    %v462 = vpop.f32.mrf.mxu0
    %v463 = vpop.f32.mrf.mxu0
    %v464 = vadd.f32 %v376, %v463
    %v465 = vpop.f32.mrf.mxu0
    %466 = vmatprep.mubr.bf16.mxu0 0
    %467 = vmatmul.mubr.bf16.gmra.mxu0 %v348
    %v468 = vpop.f32.mrf.mxu0
    %v469 = vadd.f32 %v376, %v468
    %v470 = vpop.f32.mrf.mxu0
    %v471 = vpop.f32.mrf.mxu0
    %v472 = vadd.f32 %v376, %v471
    %v473 = vpop.f32.mrf.mxu0
    %474 = vmatprep.mubr.bf16.mxu0 0
    %475 = vmatmul.mubr.bf16.gmra.mxu0 %v349
    %v476 = vpop.f32.mrf.mxu0
    %v477 = vadd.f32 %v376, %v476
    %v478 = vpop.f32.mrf.mxu0
    %v479 = vpop.f32.mrf.mxu0
    %v480 = vadd.f32 %v376, %v479
    %v481 = vpop.f32.mrf.mxu0
    %482 = vmatprep.mubr.bf16.mxu0 0
    %483 = vmatmul.mubr.bf16.gmra.mxu0 %v350
    %v484 = vpop.f32.mrf.mxu0
    %v485 = vadd.f32 %v376, %v484
    %v486 = vpop.f32.mrf.mxu0
    %v487 = vpop.f32.mrf.mxu0
    %v488 = vadd.f32 %v376, %v487
    %v489 = vpop.f32.mrf.mxu0
    %490 = vmatprep.mubr.bf16.mxu0 0
    %491 = vmatmul.mubr.bf16.gmra.mxu0 %v351
    %v492 = vpop.f32.mrf.mxu0
    %v493 = vadd.f32 %v376, %v492
    %v494 = vpop.f32.mrf.mxu0
    %v495 = vpop.f32.mrf.mxu0
    %v496 = vadd.f32 %v376, %v495
    %v497 = vpop.f32.mrf.mxu0
    %498 = vmatprep.mubr.bf16.mxu0 0
    %499 = vmatmul.mubr.bf16.gmra.mxu0 %v352
    %v500 = vpop.f32.mrf.mxu0
    %v501 = vadd.f32 %v376, %v500
    %v502 = vpop.f32.mrf.mxu0
    %v503 = vpop.f32.mrf.mxu0
    %v504 = vadd.f32 %v376, %v503
    %v505 = vpop.f32.mrf.mxu0
    %506 = vmatprep.mubr.bf16.mxu0 0
    %507 = vmatmul.mubr.bf16.gmra.mxu0 %v353
    %v508 = vpop.f32.mrf.mxu0
    %v509 = vadd.f32 %v376, %v508
    %v510 = vpop.f32.mrf.mxu0
    %v511 = vpop.f32.mrf.mxu0
    %v512 = vadd.f32 %v376, %v511
    %v513 = vpop.f32.mrf.mxu0
    %514 = vmatprep.mubr.bf16.mxu0 0
    %515 = vmatmul.mubr.bf16.gmra.mxu0 %v354
    %v516 = vpop.f32.mrf.mxu0
    %v517 = vadd.f32 %v376, %v516
    %v518 = vpop.f32.mrf.mxu0
    %v519 = vpop.f32.mrf.mxu0
    %v520 = vadd.f32 %v376, %v519
    %v521 = vpop.f32.mrf.mxu0
    %522 = vdwg.mxu0
    %v523 = vmax.f32 %v461, 0.0
    %v524 = vmax.f32 %v464, 0.0
    %v525 = vmax.f32 %v469, 0.0
    %v526 = vmax.f32 %v472, 0.0
    %v527 = vmax.f32 %v477, 0.0
    %v528 = vmax.f32 %v480, 0.0
    %v529 = vmax.f32 %v485, 0.0
    %v530 = vmax.f32 %v488, 0.0
    %v531 = vmax.f32 %v493, 0.0
    %v532 = vmax.f32 %v496, 0.0
    %v533 = vmax.f32 %v501, 0.0
    %v534 = vmax.f32 %v504, 0.0
    %v535 = vmax.f32 %v509, 0.0
    %v536 = vmax.f32 %v512, 0.0
    %v537 = vmax.f32 %v517, 0.0
    %v538 = vmax.f32 %v520, 0.0
    %v539 = vpack.c.bf16 %v524, %v523
    %v540 = vpack.c.bf16 %v526, %v525
    %v541 = vpack.c.bf16 %v528, %v527
    %v542 = vpack.c.bf16 %v530, %v529
    %v543 = vpack.c.bf16 %v532, %v531
    %v544 = vpack.c.bf16 %v534, %v533
    %v545 = vpack.c.bf16 %v536, %v535
    %v546 = vpack.c.bf16 %v538, %v537
    %v547 = vld [vmem:[#allocation8] sm:$0xf]
    %v548 = vld [vmem:[#allocation8 + $0x4] sm:$0xf]
    %v549 = vld [vmem:[#allocation8 + $0x8] sm:$0xf]
    %v550 = vld [vmem:[#allocation8 + $0xc] sm:$0xf]
    %v551 = vld [vmem:[#allocation8 + $0x10] sm:$0xf]
    %v552 = vld [vmem:[#allocation8 + $0x14] sm:$0xf]
    %v553 = vld [vmem:[#allocation8 + $0x18] sm:$0xf]
    %v554 = vld [vmem:[#allocation8 + $0x1c] sm:$0xf]
    %v555 = vld [vmem:[#allocation8 + $0x20] sm:$0xf]
    %v556 = vld [vmem:[#allocation8 + $0x24] sm:$0xf]
    %v557 = vld [vmem:[#allocation8 + $0x28] sm:$0xf]
    %v558 = vld [vmem:[#allocation8 + $0x2c] sm:$0xf]
    %v559 = vld [vmem:[#allocation8 + $0x30] sm:$0xf]
    %v560 = vld [vmem:[#allocation8 + $0x34] sm:$0xf]
    %v561 = vld [vmem:[#allocation8 + $0x38] sm:$0xf]
    %v562 = vld [vmem:[#allocation8 + $0x3c] sm:$0xf]
    %v579 = vunpack.c.l.b16 %v547
    %v580 = vunpack.c.l.b16 %v548
    %v581 = vunpack.c.l.b16 %v549
    %v582 = vunpack.c.l.b16 %v550
    %v583 = vunpack.c.l.b16 %v551
    %v584 = vunpack.c.l.b16 %v552
    %v585 = vunpack.c.l.b16 %v553
    %v586 = vunpack.c.l.b16 %v554
    %v587 = vunpack.c.l.b16 %v555
    %v588 = vunpack.c.l.b16 %v556
    %v589 = vunpack.c.l.b16 %v557
    %v590 = vunpack.c.l.b16 %v558
    %v591 = vunpack.c.l.b16 %v559
    %v592 = vunpack.c.l.b16 %v560
    %v593 = vunpack.c.l.b16 %v561
    %v594 = vunpack.c.l.b16 %v562
    %v595 = vpack.c.b16 %v580, %v579
    %v596 = vpack.c.b16 %v582, %v581
    %v597 = vpack.c.b16 %v584, %v583
    %v598 = vpack.c.b16 %v586, %v585
    %v599 = vpack.c.b16 %v588, %v587
    %v600 = vpack.c.b16 %v590, %v589
    %v601 = vpack.c.b16 %v592, %v591
    %v602 = vpack.c.b16 %v594, %v593
    %611 = vmatprep.subr.bf16.mxu0 0
    %612 = vmatpush1.bf16.msra.mxu0 %v602
    %613 = vmatprep.subr.bf16.mxu0 0
    %614 = vmatpush1.bf16.msra.mxu0 %v601
    %615 = vmatprep.subr.bf16.mxu0 0
    %616 = vmatpush1.bf16.msra.mxu0 %v600
    %617 = vmatprep.subr.bf16.mxu0 0
    %618 = vmatpush1.bf16.msra.mxu0 %v599
    %619 = vmatprep.subr.bf16.mxu0 0
    %620 = vmatpush1.bf16.msra.mxu0 %v598
    %621 = vmatprep.subr.bf16.mxu0 0
    %622 = vmatpush1.bf16.msra.mxu0 %v597
    %623 = vmatprep.subr.bf16.mxu0 0
    %624 = vmatpush1.bf16.msra.mxu0 %v596
    %625 = vmatprep.subr.bf16.mxu0 0
    %626 = vmatpush1.bf16.msra.mxu0 %v595
    %627 = vmatprep.subr.bf16.mxu0 0
    %628 = vmatpush2.bf16.msra.mxu0 0
    %629 = vmatprep.subr.bf16.mxu0 0
    %630 = vmatpush2.bf16.msra.mxu0 0
    %631 = vmatprep.subr.bf16.mxu0 0
    %632 = vmatpush2.bf16.msra.mxu0 0
    %633 = vmatprep.subr.bf16.mxu0 0
    %634 = vmatpush2.bf16.msra.mxu0 0
    %635 = vmatprep.subr.bf16.mxu0 0
    %636 = vmatpush2.bf16.msra.mxu0 0
    %637 = vmatprep.subr.bf16.mxu0 0
    %638 = vmatpush2.bf16.msra.mxu0 0
    %639 = vmatprep.subr.bf16.mxu0 0
    %640 = vmatpush2.bf16.msra.mxu0 0
    %641 = vmatprep.subr.bf16.mxu0 0
    %642 = vmatpush2.bf16.msra.mxu0 0
    %643 = vmatprep.mubr.bf16.mxu0 0
    %644 = vmatmul.mubr.bf16.gmra.mxu0 %v539
    %v645 = vpop.f32.mrf.mxu0
    %v646 = vadd.f32 0.0, %v645
    %v647 = vpop.f32.mrf.mxu0
    %v648 = vpop.f32.mrf.mxu0
    %v649 = vadd.f32 0.0, %v648
    %v650 = vpop.f32.mrf.mxu0
    %651 = vmatprep.mubr.bf16.mxu0 0
    %652 = vmatmul.mubr.bf16.gmra.mxu0 %v540
    %v653 = vpop.f32.mrf.mxu0
    %v654 = vadd.f32 0.0, %v653
    %v655 = vpop.f32.mrf.mxu0
    %v656 = vpop.f32.mrf.mxu0
    %v657 = vadd.f32 0.0, %v656
    %v658 = vpop.f32.mrf.mxu0
    %659 = vmatprep.mubr.bf16.mxu0 0
    %660 = vmatmul.mubr.bf16.gmra.mxu0 %v541
    %v661 = vpop.f32.mrf.mxu0
    %v662 = vadd.f32 0.0, %v661
    %v663 = vpop.f32.mrf.mxu0
    %v664 = vpop.f32.mrf.mxu0
    %v665 = vadd.f32 0.0, %v664
    %v666 = vpop.f32.mrf.mxu0
    %667 = vmatprep.mubr.bf16.mxu0 0
    %668 = vmatmul.mubr.bf16.gmra.mxu0 %v542
    %v669 = vpop.f32.mrf.mxu0
    %v670 = vadd.f32 0.0, %v669
    %v671 = vpop.f32.mrf.mxu0
    %v672 = vpop.f32.mrf.mxu0
    %v673 = vadd.f32 0.0, %v672
    %v674 = vpop.f32.mrf.mxu0
    %675 = vmatprep.mubr.bf16.mxu0 0
    %676 = vmatmul.mubr.bf16.gmra.mxu0 %v543
    %v677 = vpop.f32.mrf.mxu0
    %v678 = vadd.f32 0.0, %v677
    %v679 = vpop.f32.mrf.mxu0
    %v680 = vpop.f32.mrf.mxu0
    %v681 = vadd.f32 0.0, %v680
    %v682 = vpop.f32.mrf.mxu0
    %683 = vmatprep.mubr.bf16.mxu0 0
    %684 = vmatmul.mubr.bf16.gmra.mxu0 %v544
    %v685 = vpop.f32.mrf.mxu0
    %v686 = vadd.f32 0.0, %v685
    %v687 = vpop.f32.mrf.mxu0
    %v688 = vpop.f32.mrf.mxu0
    %v689 = vadd.f32 0.0, %v688
    %v690 = vpop.f32.mrf.mxu0
    %691 = vmatprep.mubr.bf16.mxu0 0
    %692 = vmatmul.mubr.bf16.gmra.mxu0 %v545
    %v693 = vpop.f32.mrf.mxu0
    %v694 = vadd.f32 0.0, %v693
    %v695 = vpop.f32.mrf.mxu0
    %v696 = vpop.f32.mrf.mxu0
    %v697 = vadd.f32 0.0, %v696
    %v698 = vpop.f32.mrf.mxu0
    %699 = vmatprep.mubr.bf16.mxu0 0
    %700 = vmatmul.mubr.bf16.gmra.mxu0 %v546
    %v701 = vpop.f32.mrf.mxu0
    %v702 = vadd.f32 0.0, %v701
    %v703 = vpop.f32.mrf.mxu0
    %v704 = vpop.f32.mrf.mxu0
    %v705 = vadd.f32 0.0, %v704
    %v706 = vpop.f32.mrf.mxu0
    %707 = vdwg.mxu0
    %v708 = vpack.c.bf16 %v649, %v646
    %v709 = vpack.c.bf16 %v657, %v654
    %v710 = vpack.c.bf16 %v665, %v662
    %v711 = vpack.c.bf16 %v673, %v670
    %v712 = vpack.c.bf16 %v681, %v678
    %v713 = vpack.c.bf16 %v689, %v686
    %v714 = vpack.c.bf16 %v697, %v694
    %v715 = vpack.c.bf16 %v705, %v702
    %v716 = vld [vmem:[%s5] sm:$0x1]
    %v718 = vlaneseq
    %v719 = vshrl.u32 %v718, 7
    %v720 = vsub.s32 0, %v719
    %v721 = vrot.slane %v716, %v720
    %723 = vmatprep.subr.bf16.mxu0 0
    %724 = vmatpush1.bf16.msra.mxu0 %v715
    %725 = vmatprep.subr.bf16.mxu0 0
    %726 = vmatpush1.bf16.msra.mxu0 %v714
    %727 = vmatprep.subr.bf16.mxu0 0
    %728 = vmatpush1.bf16.msra.mxu0 %v713
    %729 = vmatprep.subr.bf16.mxu0 0
    %730 = vmatpush1.bf16.msra.mxu0 %v712
    %731 = vmatprep.subr.bf16.mxu0 0
    %732 = vmatpush1.bf16.msra.mxu0 %v711
    %733 = vmatprep.subr.bf16.mxu0 0
    %734 = vmatpush1.bf16.msra.mxu0 %v710
    %735 = vmatprep.subr.bf16.mxu0 0
    %736 = vmatpush1.bf16.msra.mxu0 %v709
    %737 = vmatprep.subr.bf16.mxu0 0
    %738 = vmatpush1.bf16.msra.mxu0 %v708
    %739 = vmatprep.subr.bf16.mxu0 0
    %740 = vmatpush2.bf16.msra.mxu0 0
    %741 = vmatprep.subr.bf16.mxu0 0
    %742 = vmatpush2.bf16.msra.mxu0 0
    %743 = vmatprep.subr.bf16.mxu0 0
    %744 = vmatpush2.bf16.msra.mxu0 0
    %745 = vmatprep.subr.bf16.mxu0 0
    %746 = vmatpush2.bf16.msra.mxu0 0
    %747 = vmatprep.subr.bf16.mxu0 0
    %748 = vmatpush2.bf16.msra.mxu0 0
    %749 = vmatprep.subr.bf16.mxu0 0
    %750 = vmatpush2.bf16.msra.mxu0 0
    %751 = vmatprep.subr.bf16.mxu0 0
    %752 = vmatpush2.bf16.msra.mxu0 0
    %753 = vmatprep.subr.bf16.mxu0 0
    %754 = vmatpush2.bf16.msra.mxu0 0
    %755 = vmatprep.mubr.bf16.mxu0 0
    %756 = vmatmul.mubr.bf16.gmra.mxu0 %v186
    %v757 = vpop.f32.mrf.mxu0
    %v758 = vadd.f32 %v721, %v757
    %v759 = vpop.f32.mrf.mxu0
    %v760 = vpop.f32.mrf.mxu0
    %v761 = vadd.f32 %v721, %v760
    %v762 = vpop.f32.mrf.mxu0
    %763 = vmatprep.mubr.bf16.mxu0 0
    %764 = vmatmul.mubr.bf16.gmra.mxu0 %v187
    %v765 = vpop.f32.mrf.mxu0
    %v766 = vadd.f32 %v721, %v765
    %v767 = vpop.f32.mrf.mxu0
    %v768 = vpop.f32.mrf.mxu0
    %v769 = vadd.f32 %v721, %v768
    %v770 = vpop.f32.mrf.mxu0
    %771 = vmatprep.mubr.bf16.mxu0 0
    %772 = vmatmul.mubr.bf16.gmra.mxu0 %v188
    %v773 = vpop.f32.mrf.mxu0
    %v774 = vadd.f32 %v721, %v773
    %v775 = vpop.f32.mrf.mxu0
    %v776 = vpop.f32.mrf.mxu0
    %v777 = vadd.f32 %v721, %v776
    %v778 = vpop.f32.mrf.mxu0
    %779 = vmatprep.mubr.bf16.mxu0 0
    %780 = vmatmul.mubr.bf16.gmra.mxu0 %v189
    %v781 = vpop.f32.mrf.mxu0
    %v782 = vadd.f32 %v721, %v781
    %v783 = vpop.f32.mrf.mxu0
    %v784 = vpop.f32.mrf.mxu0
    %v785 = vadd.f32 %v721, %v784
    %v786 = vpop.f32.mrf.mxu0
    %787 = vmatprep.mubr.bf16.mxu0 0
    %788 = vmatmul.mubr.bf16.gmra.mxu0 %v190
    %v789 = vpop.f32.mrf.mxu0
    %v790 = vadd.f32 %v721, %v789
    %v791 = vpop.f32.mrf.mxu0
    %v792 = vpop.f32.mrf.mxu0
    %v793 = vadd.f32 %v721, %v792
    %v794 = vpop.f32.mrf.mxu0
    %795 = vmatprep.mubr.bf16.mxu0 0
    %796 = vmatmul.mubr.bf16.gmra.mxu0 %v191
    %v797 = vpop.f32.mrf.mxu0
    %v798 = vadd.f32 %v721, %v797
    %v799 = vpop.f32.mrf.mxu0
    %v800 = vpop.f32.mrf.mxu0
    %v801 = vadd.f32 %v721, %v800
    %v802 = vpop.f32.mrf.mxu0
    %803 = vmatprep.mubr.bf16.mxu0 0
    %804 = vmatmul.mubr.bf16.gmra.mxu0 %v192
    %v805 = vpop.f32.mrf.mxu0
    %v806 = vadd.f32 %v721, %v805
    %v807 = vpop.f32.mrf.mxu0
    %v808 = vpop.f32.mrf.mxu0
    %v809 = vadd.f32 %v721, %v808
    %v810 = vpop.f32.mrf.mxu0
    %811 = vmatprep.mubr.bf16.mxu0 0
    %812 = vmatmul.mubr.bf16.gmra.mxu0 %v193
    %v813 = vpop.f32.mrf.mxu0
    %v814 = vadd.f32 %v721, %v813
    %v815 = vpop.f32.mrf.mxu0
    %v816 = vpop.f32.mrf.mxu0
    %v817 = vadd.f32 %v721, %v816
    %v818 = vpop.f32.mrf.mxu0
    %819 = vdwg.mxu0
    %v820 = vmax.f32 %v758, 0.0
    %v821 = vmax.f32 %v761, 0.0
    %v822 = vmax.f32 %v766, 0.0
    %v823 = vmax.f32 %v769, 0.0
    %v824 = vmax.f32 %v774, 0.0
    %v825 = vmax.f32 %v777, 0.0
    %v826 = vmax.f32 %v782, 0.0
    %v827 = vmax.f32 %v785, 0.0
    %v828 = vmax.f32 %v790, 0.0
    %v829 = vmax.f32 %v793, 0.0
    %v830 = vmax.f32 %v798, 0.0
    %v831 = vmax.f32 %v801, 0.0
    %v832 = vmax.f32 %v806, 0.0
    %v833 = vmax.f32 %v809, 0.0
    %v834 = vmax.f32 %v814, 0.0
    %v835 = vmax.f32 %v817, 0.0
    %v836 = vpack.c.bf16 %v821, %v820
    %v837 = vpack.c.bf16 %v823, %v822
    %v838 = vpack.c.bf16 %v825, %v824
    %v839 = vpack.c.bf16 %v827, %v826
    %v840 = vpack.c.bf16 %v829, %v828
    %v841 = vpack.c.bf16 %v831, %v830
    %v842 = vpack.c.bf16 %v833, %v832
    %v843 = vpack.c.bf16 %v835, %v834
    %v844 = vld [vmem:[%s6] sm:$0xf]
    %v845 = vld [vmem:[%s6 + $0x4] sm:$0xf]
    %v848 = vunpack.c.l.b16 %v844
    %v849 = vunpack.c.l.b16 %v845
    %v850 = vpack.c.b16 %v849, %v848
    %852 = vmatprep.subr.bf16.mxu0 0
    %853 = vmatpush1.bf16.msra.mxu0 %v843
    %854 = vmatprep.subr.bf16.mxu0 0
    %855 = vmatpush1.bf16.msra.mxu0 %v842
    %856 = vmatprep.subr.bf16.mxu0 0
    %857 = vmatpush1.bf16.msra.mxu0 %v841
    %858 = vmatprep.subr.bf16.mxu0 0
    %859 = vmatpush1.bf16.msra.mxu0 %v840
    %860 = vmatprep.subr.bf16.mxu0 0
    %861 = vmatpush1.bf16.msra.mxu0 %v839
    %862 = vmatprep.subr.bf16.mxu0 0
    %863 = vmatpush1.bf16.msra.mxu0 %v838
    %864 = vmatprep.subr.bf16.mxu0 0
    %865 = vmatpush1.bf16.msra.mxu0 %v837
    %866 = vmatprep.subr.bf16.mxu0 0
    %867 = vmatpush1.bf16.msra.mxu0 %v836
    %868 = vmatprep.subr.bf16.mxu0 0
    %869 = vmatpush2.bf16.msra.mxu0 0
    %870 = vmatprep.subr.bf16.mxu0 0
    %871 = vmatpush2.bf16.msra.mxu0 0
    %872 = vmatprep.subr.bf16.mxu0 0
    %873 = vmatpush2.bf16.msra.mxu0 0
    %874 = vmatprep.subr.bf16.mxu0 0
    %875 = vmatpush2.bf16.msra.mxu0 0
    %876 = vmatprep.subr.bf16.mxu0 0
    %877 = vmatpush2.bf16.msra.mxu0 0
    %878 = vmatprep.subr.bf16.mxu0 0
    %879 = vmatpush2.bf16.msra.mxu0 0
    %880 = vmatprep.subr.bf16.mxu0 0
    %881 = vmatpush2.bf16.msra.mxu0 0
    %882 = vmatprep.subr.bf16.mxu0 0
    %883 = vmatpush2.bf16.msra.mxu0 0
    %884 = vmatprep.mubr.bf16.mxu0 0
    %885 = vmatmul.mubr.bf16.gmra.mxu0 %v850
    %v886 = vpop.f32.mrf.mxu0
    %v887 = vadd.f32 0.0, %v886
    %v888 = vpop.f32.mrf.mxu0
    %v889 = vpop.f32.mrf.mxu0
    %v890 = vadd.f32 0.0, %v889
    %v891 = vpop.f32.mrf.mxu0
    %892 = vdwg.mxu0
    %v893 = vpack.c.bf16 %v890, %v887
    %v894 = vld [vmem:[#allocation10] sm:$0xf]
    %v895 = vld [vmem:[#allocation10 + $0x4] sm:$0xf]
    %v896 = vld [vmem:[#allocation10 + $0x8] sm:$0xf]
    %v897 = vld [vmem:[#allocation10 + $0xc] sm:$0xf]
    %v898 = vld [vmem:[#allocation10 + $0x10] sm:$0xf]
    %v899 = vld [vmem:[#allocation10 + $0x14] sm:$0xf]
    %v900 = vld [vmem:[#allocation10 + $0x18] sm:$0xf]
    %v901 = vld [vmem:[#allocation10 + $0x1c] sm:$0xf]
    %v902 = vld [vmem:[#allocation10 + $0x20] sm:$0xf]
    %v903 = vld [vmem:[#allocation10 + $0x24] sm:$0xf]
    %v904 = vld [vmem:[#allocation10 + $0x28] sm:$0xf]
    %v905 = vld [vmem:[#allocation10 + $0x2c] sm:$0xf]
    %v906 = vld [vmem:[#allocation10 + $0x30] sm:$0xf]
    %v907 = vld [vmem:[#allocation10 + $0x34] sm:$0xf]
    %v908 = vld [vmem:[#allocation10 + $0x38] sm:$0xf]
    %v909 = vld [vmem:[#allocation10 + $0x3c] sm:$0xf]
    %v910 = vld [vmem:[%s8] sm:$0x1]
    %v912 = vlaneseq
    %v913 = vshrl.u32 %v912, 7
    %v914 = vsub.s32 0, %v913
    %v915 = vrot.slane %v910, %v914
    %v933 = vunpack.c.l.b16 %v894
    %v934 = vunpack.c.l.b16 %v895
    %v935 = vunpack.c.l.b16 %v896
    %v936 = vunpack.c.l.b16 %v897
    %v937 = vunpack.c.l.b16 %v898
    %v938 = vunpack.c.l.b16 %v899
    %v939 = vunpack.c.l.b16 %v900
    %v940 = vunpack.c.l.b16 %v901
    %v941 = vunpack.c.l.b16 %v902
    %v942 = vunpack.c.l.b16 %v903
    %v943 = vunpack.c.l.b16 %v904
    %v944 = vunpack.c.l.b16 %v905
    %v945 = vunpack.c.l.b16 %v906
    %v946 = vunpack.c.l.b16 %v907
    %v947 = vunpack.c.l.b16 %v908
    %v948 = vunpack.c.l.b16 %v909
    %v949 = vpack.c.b16 %v934, %v933
    %v950 = vpack.c.b16 %v936, %v935
    %v951 = vpack.c.b16 %v938, %v937
    %v952 = vpack.c.b16 %v940, %v939
    %v953 = vpack.c.b16 %v942, %v941
    %v954 = vpack.c.b16 %v944, %v943
    %v955 = vpack.c.b16 %v946, %v945
    %v956 = vpack.c.b16 %v948, %v947
    %965 = vmatprep.subr.bf16.mxu0 0
    %966 = vmatpush1.bf16.msra.mxu0 %v956
    %967 = vmatprep.subr.bf16.mxu0 0
    %968 = vmatpush1.bf16.msra.mxu0 %v955
    %969 = vmatprep.subr.bf16.mxu0 0
    %970 = vmatpush1.bf16.msra.mxu0 %v954
    %971 = vmatprep.subr.bf16.mxu0 0
    %972 = vmatpush1.bf16.msra.mxu0 %v953
    %973 = vmatprep.subr.bf16.mxu0 0
    %974 = vmatpush1.bf16.msra.mxu0 %v952
    %975 = vmatprep.subr.bf16.mxu0 0
    %976 = vmatpush1.bf16.msra.mxu0 %v951
    %977 = vmatprep.subr.bf16.mxu0 0
    %978 = vmatpush1.bf16.msra.mxu0 %v950
    %979 = vmatprep.subr.bf16.mxu0 0
    %980 = vmatpush1.bf16.msra.mxu0 %v949
    %981 = vmatprep.subr.bf16.mxu0 0
    %982 = vmatpush2.bf16.msra.mxu0 0
    %983 = vmatprep.subr.bf16.mxu0 0
    %984 = vmatpush2.bf16.msra.mxu0 0
    %985 = vmatprep.subr.bf16.mxu0 0
    %986 = vmatpush2.bf16.msra.mxu0 0
    %987 = vmatprep.subr.bf16.mxu0 0
    %988 = vmatpush2.bf16.msra.mxu0 0
    %989 = vmatprep.subr.bf16.mxu0 0
    %990 = vmatpush2.bf16.msra.mxu0 0
    %991 = vmatprep.subr.bf16.mxu0 0
    %992 = vmatpush2.bf16.msra.mxu0 0
    %993 = vmatprep.subr.bf16.mxu0 0
    %994 = vmatpush2.bf16.msra.mxu0 0
    %995 = vmatprep.subr.bf16.mxu0 0
    %996 = vmatpush2.bf16.msra.mxu0 0
    %997 = vmatprep.mubr.bf16.mxu0 0
    %998 = vmatmul.mubr.bf16.gmra.mxu0 %v893
    %v999 = vpop.f32.mrf.mxu0
    %v1000 = vadd.f32 %v915, %v999
    %v1001 = vpop.f32.mrf.mxu0
    %v1002 = vpop.f32.mrf.mxu0
    %v1003 = vadd.f32 %v915, %v1002
    %v1004 = vpop.f32.mrf.mxu0
    %1005 = vdwg.mxu0
    %v1006 = vmax.f32 %v1000, 0.0
    %v1007 = vmax.f32 %v1003, 0.0
    %v1008 = vpack.c.bf16 %v1007, %v1006
    %v1009 = vld [vmem:[#allocation11] sm:$0xf]
    %v1010 = vld [vmem:[#allocation11 + $0x4] sm:$0xf]
    %v1011 = vld [vmem:[#allocation11 + $0x8] sm:$0xf]
    %v1012 = vld [vmem:[#allocation11 + $0xc] sm:$0xf]
    %v1013 = vld [vmem:[#allocation11 + $0x10] sm:$0xf]
    %v1014 = vld [vmem:[#allocation11 + $0x14] sm:$0xf]
    %v1015 = vld [vmem:[#allocation11 + $0x18] sm:$0xf]
    %v1016 = vld [vmem:[#allocation11 + $0x1c] sm:$0xf]
    %v1017 = vld [vmem:[#allocation11 + $0x20] sm:$0xf]
    %v1018 = vld [vmem:[#allocation11 + $0x24] sm:$0xf]
    %v1019 = vld [vmem:[#allocation11 + $0x28] sm:$0xf]
    %v1020 = vld [vmem:[#allocation11 + $0x2c] sm:$0xf]
    %v1021 = vld [vmem:[#allocation11 + $0x30] sm:$0xf]
    %v1022 = vld [vmem:[#allocation11 + $0x34] sm:$0xf]
    %v1023 = vld [vmem:[#allocation11 + $0x38] sm:$0xf]
    %v1024 = vld [vmem:[#allocation11 + $0x3c] sm:$0xf]
    %v1025 = vld [vmem:[%s10] sm:$0x1]
    %v1027 = vlaneseq
    %v1028 = vshrl.u32 %v1027, 7
    %v1029 = vsub.s32 0, %v1028
    %v1030 = vrot.slane %v1025, %v1029
    %v1048 = vunpack.c.l.b16 %v1009
    %v1049 = vunpack.c.l.b16 %v1010
    %v1050 = vunpack.c.l.b16 %v1011
    %v1051 = vunpack.c.l.b16 %v1012
    %v1052 = vunpack.c.l.b16 %v1013
    %v1053 = vunpack.c.l.b16 %v1014
    %v1054 = vunpack.c.l.b16 %v1015
    %v1055 = vunpack.c.l.b16 %v1016
    %v1056 = vunpack.c.l.b16 %v1017
    %v1057 = vunpack.c.l.b16 %v1018
    %v1058 = vunpack.c.l.b16 %v1019
    %v1059 = vunpack.c.l.b16 %v1020
    %v1060 = vunpack.c.l.b16 %v1021
    %v1061 = vunpack.c.l.b16 %v1022
    %v1062 = vunpack.c.l.b16 %v1023
    %v1063 = vunpack.c.l.b16 %v1024
    %v1064 = vpack.c.b16 %v1049, %v1048
    %v1065 = vpack.c.b16 %v1051, %v1050
    %v1066 = vpack.c.b16 %v1053, %v1052
    %v1067 = vpack.c.b16 %v1055, %v1054
    %v1068 = vpack.c.b16 %v1057, %v1056
    %v1069 = vpack.c.b16 %v1059, %v1058
    %v1070 = vpack.c.b16 %v1061, %v1060
    %v1071 = vpack.c.b16 %v1063, %v1062
    %1080 = vmatprep.subr.bf16.mxu0 0
    %1081 = vmatpush1.bf16.msra.mxu0 %v1071
    %1082 = vmatprep.subr.bf16.mxu0 0
    %1083 = vmatpush1.bf16.msra.mxu0 %v1070
    %1084 = vmatprep.subr.bf16.mxu0 0
    %1085 = vmatpush1.bf16.msra.mxu0 %v1069
    %1086 = vmatprep.subr.bf16.mxu0 0
    %1087 = vmatpush1.bf16.msra.mxu0 %v1068
    %1088 = vmatprep.subr.bf16.mxu0 0
    %1089 = vmatpush1.bf16.msra.mxu0 %v1067
    %1090 = vmatprep.subr.bf16.mxu0 0
    %1091 = vmatpush1.bf16.msra.mxu0 %v1066
    %1092 = vmatprep.subr.bf16.mxu0 0
    %1093 = vmatpush1.bf16.msra.mxu0 %v1065
    %1094 = vmatprep.subr.bf16.mxu0 0
    %1095 = vmatpush1.bf16.msra.mxu0 %v1064
    %1096 = vmatprep.subr.bf16.mxu0 0
    %1097 = vmatpush2.bf16.msra.mxu0 0
    %1098 = vmatprep.subr.bf16.mxu0 0
    %1099 = vmatpush2.bf16.msra.mxu0 0
    %1100 = vmatprep.subr.bf16.mxu0 0
    %1101 = vmatpush2.bf16.msra.mxu0 0
    %1102 = vmatprep.subr.bf16.mxu0 0
    %1103 = vmatpush2.bf16.msra.mxu0 0
    %1104 = vmatprep.subr.bf16.mxu0 0
    %1105 = vmatpush2.bf16.msra.mxu0 0
    %1106 = vmatprep.subr.bf16.mxu0 0
    %1107 = vmatpush2.bf16.msra.mxu0 0
    %1108 = vmatprep.subr.bf16.mxu0 0
    %1109 = vmatpush2.bf16.msra.mxu0 0
    %1110 = vmatprep.subr.bf16.mxu0 0
    %1111 = vmatpush2.bf16.msra.mxu0 0
    %1112 = vmatprep.mubr.bf16.mxu0 0
    %1113 = vmatmul.mubr.bf16.gmra.mxu0 %v1008
    %v1114 = vpop.f32.mrf.mxu0
    %v1115 = vadd.f32 %v1030, %v1114
    %v1116 = vpop.f32.mrf.mxu0
    %v1117 = vpop.f32.mrf.mxu0
    %v1118 = vadd.f32 %v1030, %v1117
    %v1119 = vpop.f32.mrf.mxu0
    %1120 = vdwg.mxu0
    %v1121 = vxor.u32 %v1115, 2147483648
    %v1122 = vxor.u32 %v1118, 2147483648
    %v1123 = vmul.f32 %v1121, 1.442695
    %v1124 = vpow.pop %v1123
    %v1125 = vmul.f32 %v1122, 1.442695
    %v1126 = vpow.pop %v1125
    %v1127 = vadd.f32 %v1124, 1.0
    %v1128 = vadd.f32 %v1126, 1.0
    %v1129 = vrcp.pop %v1127
    %v1130 = vmul.f32 1.0, %v1129
    %v1131 = vrcp.pop %v1128
    %v1132 = vmul.f32 1.0, %v1131
    %1133 = vst [vmem:[#allocation13] sm:$0xff] %v1130
    %1134 = vst [vmem:[#allocation13 + $0x8] sm:$0xff] %v1132
    // Predicated region
    $region70: #{tpu_custom_call.1} parent=1 // pred_check
      _
    $region71: #{tpu_custom_call.1} parent=1 // pred_check_branch
      %1136 = sbr.rel (0) target = $region73
    $region72: #{tpu_custom_call.1} parent=1 // pred_region
      %s1138 = ssub.s32 256, 256
      %1139 = vsyncadd [#allocation4], %s1138
      %s1140 = sshll.u32 [#allocation13], 4
      %s1141 = int_to_ptr.vmem [resolvable:$true] %s1140
      %1146 = dma.vmem_to_hbm [thread:$0]  %s1141, 256, %s11, [#allocation4], 128, 128, 8
    $region73: #{tpu_custom_call.1} parent=1 // pred_fallthru
      _
    // Predicated region
    $region74: #{tpu_custom_call.1} parent=1 // pred_check
      _
    $region75: #{tpu_custom_call.1} parent=1 // pred_check_branch
      %1148 = sbr.rel (0) target = $region77
    $region76: #{tpu_custom_call.1} parent=1 // pred_region
      %1149 = dma.done [#allocation4], 256
    $region77: #{tpu_custom_call.1} parent=1 // pred_fallthru
      _
    %1150 = vsyncpa [#allocation3], 1
    %1151 = vsyncpa [#allocation6], 1
    %1152 = vsyncpa [#allocation9], 1
    %1153 = vsyncpa [#allocation12], 1
    %1154 = vsyncpa [#allocation4], 1

</llo_original>
